<compile_context>
chip_gen: v5e
topology: v5e:2x2
jax: 0.10.0
libtpu: 0.0.40
codegen_flags: <defaults>
</compile_context>

<pallas_src>
import math

import jax
import jax.numpy as jnp
import numpy as np
from jax import lax
from jax.experimental import pallas as pl
from jax.experimental.pallas import tpu as pltpu

B = 2        # batch
TQ = 8       # decoder (target) sequence length
TK = 8       # encoder (source) sequence length
E = 32       # embedding_size (d_model)
H = 4        # n_heads
DH = E // H  # head dim
EPS = 1e-5   # LayerNorm eps (PyTorch default)
NEG = -1e9   # large finite negative (instead of -inf -> no NaN on fully masked rows)
SCALE = 1.0 / math.sqrt(E)   # module scales scores by 1/sqrt(d_model); folded into wq/bq

N_Q = B * TQ   # 16 folded decoder rows
N_K = B * TK   # 16 folded encoder rows
HQ = H * N_Q   # 64 folded (head, batch, query) rows
HK = H * N_K   # 64 folded (head, batch, key) rows/cols


# ---------------- packed-parameter slab layout (static) ----------------
# Weight slab: (E, 7*128) f32. Six 128-lane groups of matmul weights (each group starts
# on a 128-lane boundary), seventh group holds the bias/LayerNorm rows (param-major:
# one consumed group per sublane row, always starting at the group's lane 0).

GRP = 128
W_GRP = {                      # name -> (lane offset, width)
    'wqkv1': (0 * GRP, 3 * E),
    'wo1':   (1 * GRP, E),
    'wq2':   (2 * GRP, E),
    'wkv2':  (3 * GRP, 2 * E),
    'wo2':   (4 * GRP, E),
    'wf1':   (5 * GRP, 2 * E),
}
ROWS_BASE = 6 * GRP            # 768 (128-aligned)
R_ROW = {                      # name -> (sublane row, width)
    'bqkv1': (0, 3 * E), 'bo1': (1, E), 'bq2': (2, E), 'bkv2': (3, 2 * E),
    'bo2': (4, E), 'bf1': (5, 2 * E), 'bf2': (6, E),
    'g1': (7, E), 'be1': (8, E), 'g2': (9, E), 'be2': (10, E),
    'g3': (11, E), 'be3': (12, E),
}
W_COLS = 7 * GRP               # 896 lanes


def _w(w_ref, name):
    off, width = W_GRP[name]
    return w_ref[:, off:off + width]


def _row(w_ref, name):
    r, width = R_ROW[name]
    return w_ref[r:r + 1, ROWS_BASE:ROWS_BASE + width]


# constant (HQ, HK) 0/1 head-column mask (head h rows keep only columns [h*DH:(h+1)*DH]),
# padded on lanes to HK so it stacks with the additive masks.
_HEAD_COL = jnp.asarray(
    np.pad(((np.arange(E)[None, :] // DH) == (np.arange(HQ)[:, None] // N_Q)
            ).astype(np.float32),
           ((0, 0), (0, HK - E))))


# ---------------- in-kernel helpers (traced inside the Pallas kernel) ----------------

def _layer_norm(x, gamma, beta):
    mu = jnp.mean(x, axis=-1, keepdims=True)
    var = jnp.mean((x - mu) ** 2, axis=-1, keepdims=True)   # biased variance
    return (x - mu) * lax.rsqrt(var + EPS) * gamma + beta


def _tile_heads(a):
    # (rows, E) -> (H*rows, E): cheap sublane replication, no lane movement
    return jnp.concatenate([a] * H, axis=0)


_TRANS_B = (((1,), (1,)), ((), ()))   # contract last dims of both operands (A @ B^T)


def _attention(q, k, v, add_mask, head_mask, wo, bo):
    """Batch+head folded multi-head attention via tile + head-column mask.
    q, k, v: (n, E) with the softmax scale already folded into q's projection.
    add_mask: (H*n, H*n) additive (block-diag over batch&head + padding + causal).
    head_mask: (H*n, E) 0/1 — zeroes off-head columns so the E-wide contraction is
    per-head-correct; cross-head/batch blocks are killed by add_mask."""
    n_q = q.shape[0]
    qr = _tile_heads(q) * head_mask                               # (H*n, E)
    kr = _tile_heads(k)                                           # (H*n, E)
    vr = _tile_heads(v) * head_mask                               # (H*n, E) head-col sparse
    s = lax.dot_general(qr, kr, _TRANS_B,
                        preferred_element_type=jnp.float32)       # (H*n, H*n)
    s = s + add_mask
    m = jnp.max(s, axis=-1, keepdims=True)
    e = jnp.exp(s - m)                                            # masked entries -> exactly 0
    # TODO(synk): dropout on attention probabilities is identity at inference.
    p = e * pl.reciprocal(jnp.sum(e, axis=-1, keepdims=True), approx=True)
    o = jnp.dot(p, vr, preferred_element_type=jnp.float32)        # (H*n, E) head-col sparse
    proj = jnp.dot(o, wo, preferred_element_type=jnp.float32)     # (H*n, E)
    agg = proj[0:n_q, :]                                          # sum the H sublane blocks
    for h in range(1, H):
        agg = agg + proj[h * n_q:(h + 1) * n_q, :]
    return agg + bo


# ---------------- the Pallas kernel (single invocation, no grid) ----------------

def decoder_kernel(io_ref, masks_ref, w_ref, wf2_ref, out_ref):
    x = io_ref[0:N_Q, :]                       # (16, E) decoder input (batch on sublanes)
    enc = io_ref[N_Q:N_Q + N_K, :]             # (16, E) encoder output
    m_self = masks_ref[0:HQ, :]                # (64, 64) additive self-attn mask
    m_cross = masks_ref[HQ:2 * HQ, :]          # (64, 64) additive cross-attn mask
    head_mask = masks_ref[2 * HQ:3 * HQ, 0:E]  # (64, 32) 0/1 head-column mask

    # --- masked self-attention (fused QKV projection, scale pre-folded) + res + LN ---
    qkv = jnp.dot(x, _w(w_ref, 'wqkv1'),
                  preferred_element_type=jnp.float32) + _row(w_ref, 'bqkv1')
    sa = _attention(qkv[:, 0:E], qkv[:, E:2 * E], qkv[:, 2 * E:3 * E],
                    m_self, head_mask, _w(w_ref, 'wo1'), _row(w_ref, 'bo1'))
    h1 = _layer_norm(sa + x, _row(w_ref, 'g1'), _row(w_ref, 'be1'))

    # --- cross-attention (fused K/V projection) + residual + LayerNorm ---
    q2 = jnp.dot(h1, _w(w_ref, 'wq2'),
                 preferred_element_type=jnp.float32) + _row(w_ref, 'bq2')
    kv2 = jnp.dot(enc, _w(w_ref, 'wkv2'),
                  preferred_element_type=jnp.float32) + _row(w_ref, 'bkv2')
    ca = _attention(q2, kv2[:, 0:E], kv2[:, E:2 * E],
                    m_cross, head_mask, _w(w_ref, 'wo2'), _row(w_ref, 'bo2'))
    h2 = _layer_norm(ca + h1, _row(w_ref, 'g2'), _row(w_ref, 'be2'))

    # --- FFN: Linear(E, 2E) -> ReLU -> (Dropout=id) -> Linear(2E, E) ---
    ff = jnp.dot(h2, _w(w_ref, 'wf1'),
                 preferred_element_type=jnp.float32) + _row(w_ref, 'bf1')
    ff = jnp.maximum(ff, 0.0)
    ff = jnp.dot(ff, wf2_ref[...],
                 preferred_element_type=jnp.float32) + _row(w_ref, 'bf2')

    out_ref[...] = _layer_norm(ff + h2, _row(w_ref, 'g3'), _row(w_ref, 'be3'))


# ---------------- wrapper (mask/param packing = layout plumbing, done once per call) ---

def _packed_attn_mask(n_q, n_k, pad_bool, dep_add=None):
    """Additive mask (H*B*n_q, H*B*n_k) for batch+head-folded attention.
    Row order h*(B*n_q)+b*n_q+q ; col order h*(B*n_k)+b*n_k+k.  Cross batch/head -> NEG,
    padded keys -> NEG, plus the (q,k) dependency mask."""
    r = np.arange(H * B * n_q)
    c = np.arange(H * B * n_k)
    rh, rb, rq = r // (B * n_q), (r // n_q) % B, r % n_q
    ch, cb, ck = c // (B * n_k), (c // n_k) % B, c % n_k
    same = (rh[:, None] == ch[None, :]) & (rb[:, None] == cb[None, :])
    mask = jnp.where(jnp.asarray(same), 0.0, NEG).astype(jnp.float32)
    if dep_add is not None:
        mask = mask + dep_add[rq[:, None], ck[None, :]]
    pad_cols = jnp.where(pad_bool[cb, ck], NEG, 0.0).astype(jnp.float32)
    return mask + pad_cols[None, :]


def _pad_cols(a, width):
    return jnp.pad(a, ((0, 0), (0, width - a.shape[1])))


_VMEM_SPEC = pl.BlockSpec(memory_space=pltpu.MemorySpace.VMEM)   # whole array in VMEM


@jax.jit
def custom_decoder_forward(dec, enc, dep, src_pad_bool, tgt_pad_bool, P):
    # ---- pack 26 params into one 128-aligned slab (+ wf2). In a real model this is
    # pre-packed once outside the per-step call. Softmax scale folded into wq/bq here.
    rows = jnp.concatenate([
        jnp.concatenate([P['bq1'] * SCALE, P['bk1'], P['bv1']], axis=1),
        _pad_cols(P['bo1'], 3 * E),
        _pad_cols(P['bq2'] * SCALE, 3 * E),
        _pad_cols(jnp.concatenate([P['bk2'], P['bv2']], axis=1), 3 * E),
        _pad_cols(P['bo2'], 3 * E),
        _pad_cols(P['bf1'], 3 * E),
        _pad_cols(P['bf2'], 3 * E),
        _pad_cols(P['g1'], 3 * E), _pad_cols(P['be1'], 3 * E),
        _pad_cols(P['g2'], 3 * E), _pad_cols(P['be2'], 3 * E),
        _pad_cols(P['g3'], 3 * E), _pad_cols(P['be3'], 3 * E),
    ], axis=0)                                                      # (13, 96)
    rows = jnp.pad(rows, ((0, E - rows.shape[0]), (0, GRP - rows.shape[1])))  # (32, 128)

    wslab = jnp.concatenate([
        _pad_cols(jnp.concatenate([P['wq1'] * SCALE, P['wk1'], P['wv1']], axis=1), GRP),
        _pad_cols(P['wo1'], GRP),
        _pad_cols(P['wq2'] * SCALE, GRP),
        _pad_cols(jnp.concatenate([P['wk2'], P['wv2']], axis=1), GRP),
        _pad_cols(P['wo2'], GRP),
        _pad_cols(P['wf1'], GRP),
        rows,
    ], axis=1)                                                      # (32, 896) ≈ 112 KiB

    # ---- fold decoder+encoder inputs into one array; stack all masks on sublanes.
    io = jnp.concatenate([dec.reshape(N_Q, E), enc.reshape(N_K, E)], axis=0)   # (32, 32)
    m_self = _packed_attn_mask(TQ, TQ, tgt_pad_bool, dep)           # (64, 64)
    m_cross = _packed_attn_mask(TQ, TK, src_pad_bool, None)         # (64, 64)
    masks = jnp.concatenate([m_self, m_cross, _HEAD_COL], axis=0)   # (192, 64)

    out2d = pl.pallas_call(
        decoder_kernel,
        out_shape=jax.ShapeDtypeStruct((N_Q, E), jnp.float32),
        in_specs=[_VMEM_SPEC] * 4,
        out_specs=_VMEM_SPEC,
    )(io, masks, wslab, P['wf2'])

    return out2d.reshape(B, TQ, E)


# ---------------- pure-JAX reference (mirrors the PyTorch module) ----------------

def _ref_mha(qf, kf, pad_bool, dep, wq, bq, wk, bk, wv, bv, wo, bo):
    bsz, tk, _ = kf.shape
    tq = qf.shape[1]
    q = qf @ wq + bq
    k = kf @ wk + bk
    v = kf @ wv + bv
    qh = q.reshape(bsz, tq, H, DH)
    kh = k.reshape(bsz, tk, H, DH)
    vh = v.reshape(bsz, tk, H, DH)
    s = jnp.einsum('bqhe,bkhe->bhqk', qh, kh) / math.sqrt(E)
    s = jnp.where(pad_bool[:, None, None, :], -jnp.inf, s)
    if dep is not None:
        s = s + dep
    p = jax.nn.softmax(s, axis=-1)
    out = jnp.einsum('bhqk,bkhe->bqhe', p, vh).reshape(bsz, tq, E)
    return out @ wo + bo


def _ref_ln(x, g, b):
    mu = jnp.mean(x, axis=-1, keepdims=True)
    var = jnp.mean((x - mu) ** 2, axis=-1, keepdims=True)
    return (x - mu) / jnp.sqrt(var + EPS) * g + b


def reference_decoder(dec, enc, dep, src_bool, tgt_bool, P):
    sa = _ref_mha(dec, dec, tgt_bool, dep,
                  P['wq1'], P['bq1'], P['wk1'], P['bk1'],
                  P['wv1'], P['bv1'], P['wo1'], P['bo1'])
    h1 = _ref_ln(sa + dec, P['g1'], P['be1'])
    ca = _ref_mha(h1, enc, src_bool, None,
                  P['wq2'], P['bq2'], P['wk2'], P['bk2'],
                  P['wv2'], P['bv2'], P['wo2'], P['bo2'])
    h2 = _ref_ln(ca + h1, P['g2'], P['be2'])
    ff = jnp.maximum(h2 @ P['wf1'] + P['bf1'], 0.0) @ P['wf2'] + P['bf2']
    return _ref_ln(ff + h2, P['g3'], P['be3'])


# ---------------- main ----------------

if __name__ == "__main__":
    key = jax.random.PRNGKey(0)
    keys = jax.random.split(key, 40)
    ki = iter(range(40))

    def nrm(shape, scale=0.1):
        return (scale * jax.random.normal(keys[next(ki)], shape)).astype(jnp.float32)

    # inputs
    dec = nrm((B, TQ, E), 1.0)
    enc = nrm((B, TK, E), 1.0)

    # causal dependency mask (additive, finite large-negative for stability)
    qi = jnp.arange(TQ)[:, None]
    kj = jnp.arange(TQ)[None, :]
    dep_mask = jnp.where(kj <= qi, 0.0, NEG).astype(jnp.float32)

    # padding masks (True == padded); keep at least one valid key per row
    tgt_pad_bool = jnp.array([[False] * TQ,
                              [False] * (TQ - 2) + [True, True]])
    src_pad_bool = jnp.array([[False] * (TK - 1) + [True],
                              [False] * TK])

    # parameters (deterministic init; (in, out) layout, biases/LN params as (1, dim))
    P = {
        # self-attention
        'wq1': nrm((E, E)), 'bq1': nrm((1, E)),
        'wk1': nrm((E, E)), 'bk1': nrm((1, E)),
        'wv1': nrm((E, E)), 'bv1': nrm((1, E)),
        'wo1': nrm((E, E)), 'bo1': nrm((1, E)),
        # cross-attention
        'wq2': nrm((E, E)), 'bq2': nrm((1, E)),
        'wk2': nrm((E, E)), 'bk2': nrm((1, E)),
        'wv2': nrm((E, E)), 'bv2': nrm((1, E)),
        'wo2': nrm((E, E)), 'bo2': nrm((1, E)),
        # layer norms (gamma=1, beta=0 like PyTorch init)
        'g1': jnp.ones((1, E), jnp.float32), 'be1': jnp.zeros((1, E), jnp.float32),
        'g2': jnp.ones((1, E), jnp.float32), 'be2': jnp.zeros((1, E), jnp.float32),
        'g3': jnp.ones((1, E), jnp.float32), 'be3': jnp.zeros((1, E), jnp.float32),
        # FFN
        'wf1': nrm((E, 2 * E)), 'bf1': nrm((1, 2 * E)),
        'wf2': nrm((2 * E, E)), 'bf2': nrm((1, E)),
    }

    out = custom_decoder_forward(dec, enc, dep_mask, src_pad_bool, tgt_pad_bool, P)
    out = jax.block_until_ready(out)

    ref = reference_decoder(dec, enc, dep_mask, src_pad_bool, tgt_pad_bool, P)
    # tolerance slightly relaxed vs exact-divide version because the softmax denominator
    # uses the EUP approximate reciprocal (pl.reciprocal(approx=True)).
    np.testing.assert_allclose(np.asarray(out), np.asarray(ref), rtol=2e-3, atol=2e-3)

    print("KERNEL_OK")
</pallas_src>

<mosaic_0001>
module attributes {stable_mosaic.version = 11 : i64} {
  func.func @decoder_kernel(%arg0: memref<32x32xf32, #tpu.memory_space<vmem>>, %arg1: memref<192x64xf32, #tpu.memory_space<vmem>>, %arg2: memref<32x896xf32, #tpu.memory_space<vmem>>, %arg3: memref<64x32xf32, #tpu.memory_space<vmem>>, %arg4: memref<16x32xf32, #tpu.memory_space<vmem>>) attributes {dimension_semantics = [], scalar_prefetch = 0 : i64, scratch_operands = 0 : i64, tpu.core_type = #tpu.core_type<tc>} {
    %c0 = arith.constant 0 : index
    %c0_0 = arith.constant 0 : index
    %0 = vector.load %arg0[%c0, %c0_0] : memref<32x32xf32, #tpu.memory_space<vmem>>, vector<16x32xf32>
    %c16 = arith.constant 16 : index
    %c0_1 = arith.constant 0 : index
    %1 = vector.load %arg0[%c16, %c0_1] : memref<32x32xf32, #tpu.memory_space<vmem>>, vector<16x32xf32>
    %c0_2 = arith.constant 0 : index
    %c0_3 = arith.constant 0 : index
    %2 = vector.load %arg1[%c0_2, %c0_3] : memref<192x64xf32, #tpu.memory_space<vmem>>, vector<64x64xf32>
    %c64 = arith.constant 64 : index
    %c0_4 = arith.constant 0 : index
    %3 = vector.load %arg1[%c64, %c0_4] : memref<192x64xf32, #tpu.memory_space<vmem>>, vector<64x64xf32>
    %c128 = arith.constant 128 : index
    %c0_5 = arith.constant 0 : index
    %4 = vector.load %arg1[%c128, %c0_5] : memref<192x64xf32, #tpu.memory_space<vmem>>, vector<64x32xf32>
    %c0_6 = arith.constant 0 : index
    %c0_7 = arith.constant 0 : index
    %5 = vector.load %arg2[%c0_6, %c0_7] : memref<32x896xf32, #tpu.memory_space<vmem>>, vector<32x96xf32>
    %cst = arith.constant dense<0.000000e+00> : vector<16x96xf32>
    %6 = tpu.matmul %0, %5, %cst {dimension_numbers = #tpu.dot_dimension_numbers<[1], [0], [0], [1], [0, 0, 1, 1], [], []>} : vector<16x32xf32>, vector<32x96xf32>, vector<16x96xf32> -> vector<16x96xf32>
    %c0_8 = arith.constant 0 : index
    %c768 = arith.constant 768 : index
    %7 = vector.load %arg2[%c0_8, %c768] : memref<32x896xf32, #tpu.memory_space<vmem>>, vector<1x96xf32>
    %8 = vector.broadcast %7 : vector<1x96xf32> to vector<16x96xf32>
    %9 = arith.addf %6, %8 : vector<16x96xf32>
    %10 = vector.extract_strided_slice %9 {offsets = [0, 0], sizes = [16, 32], strides = [1, 1]} : vector<16x96xf32> to vector<16x32xf32>
    %11 = vector.extract_strided_slice %9 {offsets = [0, 32], sizes = [16, 32], strides = [1, 1]} : vector<16x96xf32> to vector<16x32xf32>
    %12 = vector.extract_strided_slice %9 {offsets = [0, 64], sizes = [16, 32], strides = [1, 1]} : vector<16x96xf32> to vector<16x32xf32>
    %c0_9 = arith.constant 0 : index
    %c128_10 = arith.constant 128 : index
    %13 = vector.load %arg2[%c0_9, %c128_10] : memref<32x896xf32, #tpu.memory_space<vmem>>, vector<32x32xf32>
    %c1 = arith.constant 1 : index
    %c768_11 = arith.constant 768 : index
    %14 = vector.load %arg2[%c1, %c768_11] : memref<32x896xf32, #tpu.memory_space<vmem>>, vector<1x32xf32>
    %15 = tpu.concatenate %10, %10, %10, %10 in 0 : vector<16x32xf32>, vector<16x32xf32>, vector<16x32xf32>, vector<16x32xf32> -> vector<64x32xf32>
    %16 = arith.mulf %15, %4 : vector<64x32xf32>
    %17 = tpu.concatenate %11, %11, %11, %11 in 0 : vector<16x32xf32>, vector<16x32xf32>, vector<16x32xf32>, vector<16x32xf32> -> vector<64x32xf32>
    %18 = tpu.concatenate %12, %12, %12, %12 in 0 : vector<16x32xf32>, vector<16x32xf32>, vector<16x32xf32>, vector<16x32xf32> -> vector<64x32xf32>
    %19 = arith.mulf %18, %4 : vector<64x32xf32>
    %cst_12 = arith.constant dense<0.000000e+00> : vector<64x64xf32>
    %20 = tpu.matmul %16, %17, %cst_12 {dimension_numbers = #tpu.dot_dimension_numbers<[1], [1], [0], [0], [0, 0, 1, 0], [], []>} : vector<64x32xf32>, vector<64x32xf32>, vector<64x64xf32> -> vector<64x64xf32>
    %21 = arith.addf %20, %2 : vector<64x64xf32>
    %cst_13 = arith.constant dense<0xFF800000> : vector<64xf32>
    %22 = vector.multi_reduction <maximumf>, %21, %cst_13 [1] : vector<64x64xf32> to vector<64xf32>
    %23 = vector.shape_cast %22 : vector<64xf32> to vector<64x1xf32>
    %24 = vector.broadcast %23 : vector<64x1xf32> to vector<64x64xf32>
    %25 = arith.subf %21, %24 : vector<64x64xf32>
    %26 = math.exp %25 : vector<64x64xf32>
    %cst_14 = arith.constant dense<0.000000e+00> : vector<64xf32>
    %27 = vector.multi_reduction <add>, %26, %cst_14 [1] : vector<64x64xf32> to vector<64xf32>
    %28 = vector.shape_cast %27 : vector<64xf32> to vector<64x1xf32>
    %29 = tpu.reciprocal %28 {approx = true} : vector<64x1xf32> -> vector<64x1xf32>
    %30 = vector.broadcast %29 : vector<64x1xf32> to vector<64x64xf32>
    %31 = arith.mulf %26, %30 : vector<64x64xf32>
    %cst_15 = arith.constant dense<0.000000e+00> : vector<64x32xf32>
    %32 = tpu.matmul %31, %19, %cst_15 {dimension_numbers = #tpu.dot_dimension_numbers<[1], [0], [0], [1], [0, 0, 1, 1], [], []>} : vector<64x64xf32>, vector<64x32xf32>, vector<64x32xf32> -> vector<64x32xf32>
    %cst_16 = arith.constant dense<0.000000e+00> : vector<64x32xf32>
    %33 = tpu.matmul %32, %13, %cst_16 {dimension_numbers = #tpu.dot_dimension_numbers<[1], [0], [0], [1], [0, 0, 1, 1], [], []>} : vector<64x32xf32>, vector<32x32xf32>, vector<64x32xf32> -> vector<64x32xf32>
    %34 = vector.extract_strided_slice %33 {offsets = [0, 0], sizes = [16, 32], strides = [1, 1]} : vector<64x32xf32> to vector<16x32xf32>
    %35 = vector.extract_strided_slice %33 {offsets = [16, 0], sizes = [16, 32], strides = [1, 1]} : vector<64x32xf32> to vector<16x32xf32>
    %36 = arith.addf %34, %35 : vector<16x32xf32>
    %37 = vector.extract_strided_slice %33 {offsets = [32, 0], sizes = [16, 32], strides = [1, 1]} : vector<64x32xf32> to vector<16x32xf32>
    %38 = arith.addf %36, %37 : vector<16x32xf32>
    %39 = vector.extract_strided_slice %33 {offsets = [48, 0], sizes = [16, 32], strides = [1, 1]} : vector<64x32xf32> to vector<16x32xf32>
    %40 = arith.addf %38, %39 : vector<16x32xf32>
    %41 = vector.broadcast %14 : vector<1x32xf32> to vector<16x32xf32>
    %42 = arith.addf %40, %41 : vector<16x32xf32>
    %43 = arith.addf %42, %0 : vector<16x32xf32>
    %c7 = arith.constant 7 : index
    %c768_17 = arith.constant 768 : index
    %44 = vector.load %arg2[%c7, %c768_17] : memref<32x896xf32, #tpu.memory_space<vmem>>, vector<1x32xf32>
    %c8 = arith.constant 8 : index
    %c768_18 = arith.constant 768 : index
    %45 = vector.load %arg2[%c8, %c768_18] : memref<32x896xf32, #tpu.memory_space<vmem>>, vector<1x32xf32>
    %cst_19 = arith.constant dense<0.000000e+00> : vector<16xf32>
    %46 = vector.multi_reduction <add>, %43, %cst_19 [1] : vector<16x32xf32> to vector<16xf32>
    %47 = vector.shape_cast %46 : vector<16xf32> to vector<16x1xf32>
    %cst_20 = arith.constant 3.200000e+01 : f32
    %48 = vector.broadcast %cst_20 : f32 to vector<16x1xf32>
    %49 = arith.divf %47, %48 : vector<16x1xf32>
    %50 = vector.broadcast %49 : vector<16x1xf32> to vector<16x32xf32>
    %51 = arith.subf %43, %50 : vector<16x32xf32>
    %52 = arith.mulf %51, %51 : vector<16x32xf32>
    %cst_21 = arith.constant dense<0.000000e+00> : vector<16xf32>
    %53 = vector.multi_reduction <add>, %52, %cst_21 [1] : vector<16x32xf32> to vector<16xf32>
    %54 = vector.shape_cast %53 : vector<16xf32> to vector<16x1xf32>
    %cst_22 = arith.constant 3.200000e+01 : f32
    %55 = vector.broadcast %cst_22 : f32 to vector<16x1xf32>
    %56 = arith.divf %54, %55 : vector<16x1xf32>
    %57 = vector.broadcast %49 : vector<16x1xf32> to vector<16x32xf32>
    %58 = arith.subf %43, %57 : vector<16x32xf32>
    %cst_23 = arith.constant 9.99999974E-6 : f32
    %59 = vector.broadcast %cst_23 : f32 to vector<16x1xf32>
    %60 = arith.addf %56, %59 : vector<16x1xf32>
    %61 = math.rsqrt %60 : vector<16x1xf32>
    %62 = vector.broadcast %61 : vector<16x1xf32> to vector<16x32xf32>
    %63 = arith.mulf %58, %62 : vector<16x32xf32>
    %64 = vector.broadcast %44 : vector<1x32xf32> to vector<16x32xf32>
    %65 = arith.mulf %63, %64 : vector<16x32xf32>
    %66 = vector.broadcast %45 : vector<1x32xf32> to vector<16x32xf32>
    %67 = arith.addf %65, %66 : vector<16x32xf32>
    %c0_24 = arith.constant 0 : index
    %c256 = arith.constant 256 : index
    %68 = vector.load %arg2[%c0_24, %c256] : memref<32x896xf32, #tpu.memory_space<vmem>>, vector<32x32xf32>
    %cst_25 = arith.constant dense<0.000000e+00> : vector<16x32xf32>
    %69 = tpu.matmul %67, %68, %cst_25 {dimension_numbers = #tpu.dot_dimension_numbers<[1], [0], [0], [1], [0, 0, 1, 1], [], []>} : vector<16x32xf32>, vector<32x32xf32>, vector<16x32xf32> -> vector<16x32xf32>
    %c2 = arith.constant 2 : index
    %c768_26 = arith.constant 768 : index
    %70 = vector.load %arg2[%c2, %c768_26] : memref<32x896xf32, #tpu.memory_space<vmem>>, vector<1x32xf32>
    %71 = vector.broadcast %70 : vector<1x32xf32> to vector<16x32xf32>
    %72 = arith.addf %69, %71 : vector<16x32xf32>
    %c0_27 = arith.constant 0 : index
    %c384 = arith.constant 384 : index
    %73 = vector.load %arg2[%c0_27, %c384] : memref<32x896xf32, #tpu.memory_space<vmem>>, vector<32x64xf32>
    %cst_28 = arith.constant dense<0.000000e+00> : vector<16x64xf32>
    %74 = tpu.matmul %1, %73, %cst_28 {dimension_numbers = #tpu.dot_dimension_numbers<[1], [0], [0], [1], [0, 0, 1, 1], [], []>} : vector<16x32xf32>, vector<32x64xf32>, vector<16x64xf32> -> vector<16x64xf32>
    %c3 = arith.constant 3 : index
    %c768_29 = arith.constant 768 : index
    %75 = vector.load %arg2[%c3, %c768_29] : memref<32x896xf32, #tpu.memory_space<vmem>>, vector<1x64xf32>
    %76 = vector.broadcast %75 : vector<1x64xf32> to vector<16x64xf32>
    %77 = arith.addf %74, %76 : vector<16x64xf32>
    %78 = vector.extract_strided_slice %77 {offsets = [0, 0], sizes = [16, 32], strides = [1, 1]} : vector<16x64xf32> to vector<16x32xf32>
    %79 = vector.extract_strided_slice %77 {offsets = [0, 32], sizes = [16, 32], strides = [1, 1]} : vector<16x64xf32> to vector<16x32xf32>
    %c0_30 = arith.constant 0 : index
    %c512 = arith.constant 512 : index
    %80 = vector.load %arg2[%c0_30, %c512] : memref<32x896xf32, #tpu.memory_space<vmem>>, vector<32x32xf32>
    %c4 = arith.constant 4 : index
    %c768_31 = arith.constant 768 : index
    %81 = vector.load %arg2[%c4, %c768_31] : memref<32x896xf32, #tpu.memory_space<vmem>>, vector<1x32xf32>
    %82 = tpu.concatenate %72, %72, %72, %72 in 0 : vector<16x32xf32>, vector<16x32xf32>, vector<16x32xf32>, vector<16x32xf32> -> vector<64x32xf32>
    %83 = arith.mulf %82, %4 : vector<64x32xf32>
    %84 = tpu.concatenate %78, %78, %78, %78 in 0 : vector<16x32xf32>, vector<16x32xf32>, vector<16x32xf32>, vector<16x32xf32> -> vector<64x32xf32>
    %85 = tpu.concatenate %79, %79, %79, %79 in 0 : vector<16x32xf32>, vector<16x32xf32>, vector<16x32xf32>, vector<16x32xf32> -> vector<64x32xf32>
    %86 = arith.mulf %85, %4 : vector<64x32xf32>
    %cst_32 = arith.constant dense<0.000000e+00> : vector<64x64xf32>
    %87 = tpu.matmul %83, %84, %cst_32 {dimension_numbers = #tpu.dot_dimension_numbers<[1], [1], [0], [0], [0, 0, 1, 0], [], []>} : vector<64x32xf32>, vector<64x32xf32>, vector<64x64xf32> -> vector<64x64xf32>
    %88 = arith.addf %87, %3 : vector<64x64xf32>
    %cst_33 = arith.constant dense<0xFF800000> : vector<64xf32>
    %89 = vector.multi_reduction <maximumf>, %88, %cst_33 [1] : vector<64x64xf32> to vector<64xf32>
    %90 = vector.shape_cast %89 : vector<64xf32> to vector<64x1xf32>
    %91 = vector.broadcast %90 : vector<64x1xf32> to vector<64x64xf32>
    %92 = arith.subf %88, %91 : vector<64x64xf32>
    %93 = math.exp %92 : vector<64x64xf32>
    %cst_34 = arith.constant dense<0.000000e+00> : vector<64xf32>
    %94 = vector.multi_reduction <add>, %93, %cst_34 [1] : vector<64x64xf32> to vector<64xf32>
    %95 = vector.shape_cast %94 : vector<64xf32> to vector<64x1xf32>
    %96 = tpu.reciprocal %95 {approx = true} : vector<64x1xf32> -> vector<64x1xf32>
    %97 = vector.broadcast %96 : vector<64x1xf32> to vector<64x64xf32>
    %98 = arith.mulf %93, %97 : vector<64x64xf32>
    %cst_35 = arith.constant dense<0.000000e+00> : vector<64x32xf32>
    %99 = tpu.matmul %98, %86, %cst_35 {dimension_numbers = #tpu.dot_dimension_numbers<[1], [0], [0], [1], [0, 0, 1, 1], [], []>} : vector<64x64xf32>, vector<64x32xf32>, vector<64x32xf32> -> vector<64x32xf32>
    %cst_36 = arith.constant dense<0.000000e+00> : vector<64x32xf32>
    %100 = tpu.matmul %99, %80, %cst_36 {dimension_numbers = #tpu.dot_dimension_numbers<[1], [0], [0], [1], [0, 0, 1, 1], [], []>} : vector<64x32xf32>, vector<32x32xf32>, vector<64x32xf32> -> vector<64x32xf32>
    %101 = vector.extract_strided_slice %100 {offsets = [0, 0], sizes = [16, 32], strides = [1, 1]} : vector<64x32xf32> to vector<16x32xf32>
    %102 = vector.extract_strided_slice %100 {offsets = [16, 0], sizes = [16, 32], strides = [1, 1]} : vector<64x32xf32> to vector<16x32xf32>
    %103 = arith.addf %101, %102 : vector<16x32xf32>
    %104 = vector.extract_strided_slice %100 {offsets = [32, 0], sizes = [16, 32], strides = [1, 1]} : vector<64x32xf32> to vector<16x32xf32>
    %105 = arith.addf %103, %104 : vector<16x32xf32>
    %106 = vector.extract_strided_slice %100 {offsets = [48, 0], sizes = [16, 32], strides = [1, 1]} : vector<64x32xf32> to vector<16x32xf32>
    %107 = arith.addf %105, %106 : vector<16x32xf32>
    %108 = vector.broadcast %81 : vector<1x32xf32> to vector<16x32xf32>
    %109 = arith.addf %107, %108 : vector<16x32xf32>
    %110 = arith.addf %109, %67 : vector<16x32xf32>
    %c9 = arith.constant 9 : index
    %c768_37 = arith.constant 768 : index
    %111 = vector.load %arg2[%c9, %c768_37] : memref<32x896xf32, #tpu.memory_space<vmem>>, vector<1x32xf32>
    %c10 = arith.constant 10 : index
    %c768_38 = arith.constant 768 : index
    %112 = vector.load %arg2[%c10, %c768_38] : memref<32x896xf32, #tpu.memory_space<vmem>>, vector<1x32xf32>
    %cst_39 = arith.constant dense<0.000000e+00> : vector<16xf32>
    %113 = vector.multi_reduction <add>, %110, %cst_39 [1] : vector<16x32xf32> to vector<16xf32>
    %114 = vector.shape_cast %113 : vector<16xf32> to vector<16x1xf32>
    %cst_40 = arith.constant 3.200000e+01 : f32
    %115 = vector.broadcast %cst_40 : f32 to vector<16x1xf32>
    %116 = arith.divf %114, %115 : vector<16x1xf32>
    %117 = vector.broadcast %116 : vector<16x1xf32> to vector<16x32xf32>
    %118 = arith.subf %110, %117 : vector<16x32xf32>
    %119 = arith.mulf %118, %118 : vector<16x32xf32>
    %cst_41 = arith.constant dense<0.000000e+00> : vector<16xf32>
    %120 = vector.multi_reduction <add>, %119, %cst_41 [1] : vector<16x32xf32> to vector<16xf32>
    %121 = vector.shape_cast %120 : vector<16xf32> to vector<16x1xf32>
    %cst_42 = arith.constant 3.200000e+01 : f32
    %122 = vector.broadcast %cst_42 : f32 to vector<16x1xf32>
    %123 = arith.divf %121, %122 : vector<16x1xf32>
    %124 = vector.broadcast %116 : vector<16x1xf32> to vector<16x32xf32>
    %125 = arith.subf %110, %124 : vector<16x32xf32>
    %cst_43 = arith.constant 9.99999974E-6 : f32
    %126 = vector.broadcast %cst_43 : f32 to vector<16x1xf32>
    %127 = arith.addf %123, %126 : vector<16x1xf32>
    %128 = math.rsqrt %127 : vector<16x1xf32>
    %129 = vector.broadcast %128 : vector<16x1xf32> to vector<16x32xf32>
    %130 = arith.mulf %125, %129 : vector<16x32xf32>
    %131 = vector.broadcast %111 : vector<1x32xf32> to vector<16x32xf32>
    %132 = arith.mulf %130, %131 : vector<16x32xf32>
    %133 = vector.broadcast %112 : vector<1x32xf32> to vector<16x32xf32>
    %134 = arith.addf %132, %133 : vector<16x32xf32>
    %c0_44 = arith.constant 0 : index
    %c640 = arith.constant 640 : index
    %135 = vector.load %arg2[%c0_44, %c640] : memref<32x896xf32, #tpu.memory_space<vmem>>, vector<32x64xf32>
    %cst_45 = arith.constant dense<0.000000e+00> : vector<16x64xf32>
    %136 = tpu.matmul %134, %135, %cst_45 {dimension_numbers = #tpu.dot_dimension_numbers<[1], [0], [0], [1], [0, 0, 1, 1], [], []>} : vector<16x32xf32>, vector<32x64xf32>, vector<16x64xf32> -> vector<16x64xf32>
    %c5 = arith.constant 5 : index
    %c768_46 = arith.constant 768 : index
    %137 = vector.load %arg2[%c5, %c768_46] : memref<32x896xf32, #tpu.memory_space<vmem>>, vector<1x64xf32>
    %138 = vector.broadcast %137 : vector<1x64xf32> to vector<16x64xf32>
    %139 = arith.addf %136, %138 : vector<16x64xf32>
    %cst_47 = arith.constant 0.000000e+00 : f32
    %140 = vector.broadcast %cst_47 : f32 to vector<16x64xf32>
    %141 = arith.maximumf %139, %140 : vector<16x64xf32>
    %c0_48 = arith.constant 0 : index
    %c0_49 = arith.constant 0 : index
    %142 = vector.load %arg3[%c0_48, %c0_49] : memref<64x32xf32, #tpu.memory_space<vmem>>, vector<64x32xf32>
    %cst_50 = arith.constant dense<0.000000e+00> : vector<16x32xf32>
    %143 = tpu.matmul %141, %142, %cst_50 {dimension_numbers = #tpu.dot_dimension_numbers<[1], [0], [0], [1], [0, 0, 1, 1], [], []>} : vector<16x64xf32>, vector<64x32xf32>, vector<16x32xf32> -> vector<16x32xf32>
    %c6 = arith.constant 6 : index
    %c768_51 = arith.constant 768 : index
    %144 = vector.load %arg2[%c6, %c768_51] : memref<32x896xf32, #tpu.memory_space<vmem>>, vector<1x32xf32>
    %145 = vector.broadcast %144 : vector<1x32xf32> to vector<16x32xf32>
    %146 = arith.addf %143, %145 : vector<16x32xf32>
    %147 = arith.addf %146, %134 : vector<16x32xf32>
    %c11 = arith.constant 11 : index
    %c768_52 = arith.constant 768 : index
    %148 = vector.load %arg2[%c11, %c768_52] : memref<32x896xf32, #tpu.memory_space<vmem>>, vector<1x32xf32>
    %c12 = arith.constant 12 : index
    %c768_53 = arith.constant 768 : index
    %149 = vector.load %arg2[%c12, %c768_53] : memref<32x896xf32, #tpu.memory_space<vmem>>, vector<1x32xf32>
    %cst_54 = arith.constant dense<0.000000e+00> : vector<16xf32>
    %150 = vector.multi_reduction <add>, %147, %cst_54 [1] : vector<16x32xf32> to vector<16xf32>
    %151 = vector.shape_cast %150 : vector<16xf32> to vector<16x1xf32>
    %cst_55 = arith.constant 3.200000e+01 : f32
    %152 = vector.broadcast %cst_55 : f32 to vector<16x1xf32>
    %153 = arith.divf %151, %152 : vector<16x1xf32>
    %154 = vector.broadcast %153 : vector<16x1xf32> to vector<16x32xf32>
    %155 = arith.subf %147, %154 : vector<16x32xf32>
    %156 = arith.mulf %155, %155 : vector<16x32xf32>
    %cst_56 = arith.constant dense<0.000000e+00> : vector<16xf32>
    %157 = vector.multi_reduction <add>, %156, %cst_56 [1] : vector<16x32xf32> to vector<16xf32>
    %158 = vector.shape_cast %157 : vector<16xf32> to vector<16x1xf32>
    %cst_57 = arith.constant 3.200000e+01 : f32
    %159 = vector.broadcast %cst_57 : f32 to vector<16x1xf32>
    %160 = arith.divf %158, %159 : vector<16x1xf32>
    %161 = vector.broadcast %153 : vector<16x1xf32> to vector<16x32xf32>
    %162 = arith.subf %147, %161 : vector<16x32xf32>
    %cst_58 = arith.constant 9.99999974E-6 : f32
    %163 = vector.broadcast %cst_58 : f32 to vector<16x1xf32>
    %164 = arith.addf %160, %163 : vector<16x1xf32>
    %165 = math.rsqrt %164 : vector<16x1xf32>
    %166 = vector.broadcast %165 : vector<16x1xf32> to vector<16x32xf32>
    %167 = arith.mulf %162, %166 : vector<16x32xf32>
    %168 = vector.broadcast %148 : vector<1x32xf32> to vector<16x32xf32>
    %169 = arith.mulf %167, %168 : vector<16x32xf32>
    %170 = vector.broadcast %149 : vector<1x32xf32> to vector<16x32xf32>
    %171 = arith.addf %169, %170 : vector<16x32xf32>
    %c0_59 = arith.constant 0 : index
    %c0_60 = arith.constant 0 : index
    %172 = vector.load %arg4[%c0_59, %c0_60] : memref<16x32xf32, #tpu.memory_space<vmem>>, vector<16x32xf32>
    tpu.vector_store %arg4[%c0_59, %c0_60], %171 {strides = array<i32>} : memref<16x32xf32, #tpu.memory_space<vmem>>, vector<16x32xf32>,
    return
  }
}

</mosaic_0001>

<llo_original>
// kernel: custom_decoder_forward.1
$region0: #{custom_decoder_forward.1}
  #allocation0 [shape = 'u32[]', space=smem, size = 0x4, offset = 0x4, fixed_abs, tag = 'smem constant byte address 0x4 - core index']
  #allocation1 [shape = 'u32[72,128]{1,0:T(1,128)}', space=vmem, size = 0x9000, scoped, tag = 'internal scratch']
  %s0 = inlined_call_operand.vmem [shape: f32[32,32], index: 0, kind: input, shape index: {}]
  %s1 = inlined_call_operand.vmem [shape: f32[192,64], index: 1, kind: input, shape index: {}]
  %s2 = inlined_call_operand.vmem [shape: f32[32,896], index: 2, kind: input, shape index: {}]
  %s3 = inlined_call_operand.vmem [shape: f32[64,32], index: 3, kind: input, shape index: {}]
  %s4 = inlined_call_operand.hbm [shape: f32[16,32], index: 4, kind: output, shape index: {}]
  %s5 = sld [smem:[#allocation0]]
  $region26: #{custom_decoder_forward.1} parent=0
    _
  %s7 = ssub.s32 1, %s5
  %s8 = scalar_select 0, %s7, %s5
  $region1: #{custom_decoder_forward.1} parent=0
    #allocation2 [shape = 'u8[8192]{0}', space=vmem, size = 0x2000, scoped, tag = 'output window, operand 0, single buffered']
    #allocation3 [shape = 's32[1]{0}', space=sflag, size = 0x4, scoped, tag = 'scoped memory for custom_decoder_forward.1']
    %9 = vsyncpa [#allocation3], 0
    // Predicated region
    $region2: #{custom_decoder_forward.1} parent=1 // pred_check
      _
    $region3: #{custom_decoder_forward.1} parent=1 // pred_check_branch
      %11 = sbr.rel (0) target = $region5
    $region4: #{custom_decoder_forward.1} parent=1 // pred_region
      _
    $region5: #{custom_decoder_forward.1} parent=1 // pred_fallthru
      _
    // Predicated region
    $region6: #{custom_decoder_forward.1} parent=1 // pred_check
      _
    $region7: #{custom_decoder_forward.1} parent=1 // pred_check_branch
      %13 = sbr.rel (0) target = $region9
    $region8: #{custom_decoder_forward.1} parent=1 // pred_region
      _
    $region9: #{custom_decoder_forward.1} parent=1 // pred_fallthru
      _
    // Predicated region
    $region10: #{custom_decoder_forward.1} parent=1 // pred_check
      _
    $region11: #{custom_decoder_forward.1} parent=1 // pred_check_branch
      %15 = sbr.rel (0) target = $region13
    $region12: #{custom_decoder_forward.1} parent=1 // pred_region
      _
    $region13: #{custom_decoder_forward.1} parent=1 // pred_fallthru
      _
    // Predicated region
    $region14: #{custom_decoder_forward.1} parent=1 // pred_check
      _
    $region15: #{custom_decoder_forward.1} parent=1 // pred_check_branch
      %17 = sbr.rel (0) target = $region17
    $region16: #{custom_decoder_forward.1} parent=1 // pred_region
      _
    $region17: #{custom_decoder_forward.1} parent=1 // pred_fallthru
      _
    %v18 = vld [vmem:[%s0] sm:$0xff]
    %v19 = vld [vmem:[%s0 + $0x8] sm:$0xff]
    %v20 = vld [vmem:[%s0 + $0x10] sm:$0xff]
    %v21 = vld [vmem:[%s0 + $0x18] sm:$0xff]
    %v22 = vld [vmem:[%s1] sm:$0xff]
    %v23 = vld [vmem:[%s1 + $0x8] sm:$0xff]
    %v24 = vld [vmem:[%s1 + $0x10] sm:$0xff]
    %v25 = vld [vmem:[%s1 + $0x18] sm:$0xff]
    %v26 = vld [vmem:[%s1 + $0x20] sm:$0xff]
    %v27 = vld [vmem:[%s1 + $0x28] sm:$0xff]
    %v28 = vld [vmem:[%s1 + $0x30] sm:$0xff]
    %v29 = vld [vmem:[%s1 + $0x38] sm:$0xff]
    %v30 = vld [vmem:[%s1 + $0x40] sm:$0xff]
    %v31 = vld [vmem:[%s1 + $0x48] sm:$0xff]
    %v32 = vld [vmem:[%s1 + $0x50] sm:$0xff]
    %v33 = vld [vmem:[%s1 + $0x58] sm:$0xff]
    %v34 = vld [vmem:[%s1 + $0x60] sm:$0xff]
    %v35 = vld [vmem:[%s1 + $0x68] sm:$0xff]
    %v36 = vld [vmem:[%s1 + $0x70] sm:$0xff]
    %v37 = vld [vmem:[%s1 + $0x78] sm:$0xff]
    %v38 = vld [vmem:[%s1 + $0x80] sm:$0xff]
    %v39 = vld [vmem:[%s1 + $0x88] sm:$0xff]
    %v40 = vld [vmem:[%s1 + $0x90] sm:$0xff]
    %v41 = vld [vmem:[%s1 + $0x98] sm:$0xff]
    %v42 = vld [vmem:[%s1 + $0xa0] sm:$0xff]
    %v43 = vld [vmem:[%s1 + $0xa8] sm:$0xff]
    %v44 = vld [vmem:[%s1 + $0xb0] sm:$0xff]
    %v45 = vld [vmem:[%s1 + $0xb8] sm:$0xff]
    %v46 = vld [vmem:[%s2] sm:$0xff]
    %v47 = vld [vmem:[%s2 + $0x38] sm:$0xff]
    %v48 = vld [vmem:[%s2 + $0x70] sm:$0xff]
    %v49 = vld [vmem:[%s2 + $0xa8] sm:$0xff]
    %v50 = vld [vmem:[%s2 + $0x30] ss:$0 sm:$0xff]
    %vm51 = vcmask 261120
    %v53 = vsel %vm51, %v18, 0
    %v56 = vsel %vm51, %v19, 0
    %58 = vmatpush.msra.mxu0 0.0
    %59 = vmatpush.msra.mxu0 0.0
    %60 = vmatpush.msra.mxu0 0.0
    %61 = vmatpush.msra.mxu0 0.0
    %62 = vmatpush.msra.mxu0 0.0
    %63 = vmatpush.msra.mxu0 0.0
    %64 = vmatpush.msra.mxu0 0.0
    %65 = vmatpush.msra.mxu0 0.0
    %66 = vmatpush.msra.mxu0 0.0
    %67 = vmatpush.msra.mxu0 0.0
    %68 = vmatpush.msra.mxu0 0.0
    %69 = vmatpush.msra.mxu0 0.0
    %70 = vmatpush.msra.mxu0 %v49
    %71 = vmatpush.msra.mxu0 %v48
    %72 = vmatpush.msra.mxu0 %v47
    %73 = vmatpush.msra.mxu0 %v46
    %74 = vmatmul.f32.gmra.mxu0 %v53
    %v75 = vpop.f32.mrf.mxu0
    %v76 = vadd.f32 %v50, %v75
    %77 = vmatmul.f32.gmra.mxu0 %v56
    %v78 = vpop.f32.mrf.mxu0
    %v79 = vadd.f32 %v50, %v78
    %80 = vdwg.mxu0
    %v81 = vld [vmem:[%s2 + $0x8] sm:$0xff]
    %v82 = vld [vmem:[%s2 + $0x40] sm:$0xff]
    %v83 = vld [vmem:[%s2 + $0x78] sm:$0xff]
    %v84 = vld [vmem:[%s2 + $0xb0] sm:$0xff]
    %v85 = vld [vmem:[%s2 + $0x31] ss:$0 sm:$0xff]
    %v86 = vmul.f32 %v76, %v38
    %v87 = vmul.f32 %v79, %v39
    %v88 = vmul.f32 %v76, %v40
    %v89 = vmul.f32 %v79, %v41
    %v90 = vmul.f32 %v76, %v42
    %v91 = vmul.f32 %v79, %v43
    %v92 = vmul.f32 %v76, %v44
    %v93 = vmul.f32 %v79, %v45
    %102 = vrot.lane.b32.xlu0 %v38, 64
    %v103 = vpop.permute.xlu0 %102
    %104 = vrot.lane.b32.xlu0 %v39, 64
    %v105 = vpop.permute.xlu0 %104
    %106 = vrot.lane.b32.xlu0 %v40, 64
    %v107 = vpop.permute.xlu0 %106
    %108 = vrot.lane.b32.xlu0 %v41, 64
    %v109 = vpop.permute.xlu0 %108
    %110 = vrot.lane.b32.xlu0 %v42, 64
    %v111 = vpop.permute.xlu0 %110
    %112 = vrot.lane.b32.xlu0 %v43, 64
    %v113 = vpop.permute.xlu0 %112
    %114 = vrot.lane.b32.xlu0 %v44, 64
    %v115 = vpop.permute.xlu0 %114
    %116 = vrot.lane.b32.xlu0 %v45, 64
    %v117 = vpop.permute.xlu0 %116
    %v126 = vmul.f32 %v76, %v103
    %v127 = vmul.f32 %v79, %v105
    %v128 = vmul.f32 %v76, %v107
    %v129 = vmul.f32 %v79, %v109
    %v130 = vmul.f32 %v76, %v111
    %v131 = vmul.f32 %v79, %v113
    %v132 = vmul.f32 %v76, %v115
    %v133 = vmul.f32 %v79, %v117
    %136 = vrot.lane.b32.xlu0 %v76, 96
    %v137 = vpop.permute.xlu0 %136
    %138 = vrot.lane.b32.xlu0 %v79, 96
    %v139 = vpop.permute.xlu0 %138
    %v141 = vsel %vm51, %v86, 0
    %v144 = vsel %vm51, %v87, 0
    %v147 = vsel %vm51, %v88, 0
    %v150 = vsel %vm51, %v89, 0
    %v153 = vsel %vm51, %v90, 0
    %v156 = vsel %vm51, %v91, 0
    %v159 = vsel %vm51, %v92, 0
    %v162 = vsel %vm51, %v93, 0
    %v164 = vsel %vm51, %v137, 0
    %v166 = vsel %vm51, %v139, 0
    %168 = vmatpush.xpose.msra.mxu0 0.0
    %169 = vmatpush.xpose.msra.mxu0 0.0
    %170 = vmatpush.xpose.msra.mxu0 0.0
    %171 = vmatpush.xpose.msra.mxu0 0.0
    %172 = vmatpush.xpose.msra.mxu0 0.0
    %173 = vmatpush.xpose.msra.mxu0 0.0
    %174 = vmatpush.xpose.msra.mxu0 0.0
    %175 = vmatpush.xpose.msra.mxu0 0.0
    %176 = vmatpush.xpose.msra.mxu0 %v166
    %177 = vmatpush.xpose.msra.mxu0 %v164
    %178 = vmatpush.xpose.msra.mxu0 %v166
    %179 = vmatpush.xpose.msra.mxu0 %v164
    %180 = vmatpush.xpose.msra.mxu0 %v166
    %181 = vmatpush.xpose.msra.mxu0 %v164
    %182 = vmatpush.xpose.msra.mxu0 %v166
    %183 = vmatpush.xpose.msra.mxu0 %v164
    %184 = vmatmul.f32.gmra.mxu0 %v141
    %v185 = vpop.f32.mrf.mxu0
    %v186 = vadd.f32 %v22, %v185
    %187 = vmatmul.f32.gmra.mxu0 %v144
    %v188 = vpop.f32.mrf.mxu0
    %v189 = vadd.f32 %v23, %v188
    %190 = vmatmul.f32.gmra.mxu0 %v147
    %v191 = vpop.f32.mrf.mxu0
    %v192 = vadd.f32 %v24, %v191
    %193 = vmatmul.f32.gmra.mxu0 %v150
    %v194 = vpop.f32.mrf.mxu0
    %v195 = vadd.f32 %v25, %v194
    %196 = vmatmul.f32.gmra.mxu0 %v153
    %v197 = vpop.f32.mrf.mxu0
    %v198 = vadd.f32 %v26, %v197
    %199 = vmatmul.f32.gmra.mxu0 %v156
    %v200 = vpop.f32.mrf.mxu0
    %v201 = vadd.f32 %v27, %v200
    %202 = vmatmul.f32.gmra.mxu0 %v159
    %v203 = vpop.f32.mrf.mxu0
    %v204 = vadd.f32 %v28, %v203
    %205 = vmatmul.f32.gmra.mxu0 %v162
    %v206 = vpop.f32.mrf.mxu0
    %v207 = vadd.f32 %v29, %v206
    %208 = vdwg.mxu0
    %vm209 = vcmask 523264
    %v210 = vsel %vm209, %v186, -inf
    %211 = vmax.xlane.f32.xlu0 %v210
    %v212 = vpop.xlane.xlu0 %211
    %v213 = vsel %vm209, %v189, -inf
    %214 = vmax.xlane.f32.xlu0 %v213
    %v215 = vpop.xlane.xlu0 %214
    %v216 = vsel %vm209, %v192, -inf
    %217 = vmax.xlane.f32.xlu0 %v216
    %v218 = vpop.xlane.xlu0 %217
    %v219 = vsel %vm209, %v195, -inf
    %220 = vmax.xlane.f32.xlu0 %v219
    %v221 = vpop.xlane.xlu0 %220
    %v222 = vsel %vm209, %v198, -inf
    %223 = vmax.xlane.f32.xlu0 %v222
    %v224 = vpop.xlane.xlu0 %223
    %v225 = vsel %vm209, %v201, -inf
    %226 = vmax.xlane.f32.xlu0 %v225
    %v227 = vpop.xlane.xlu0 %226
    %v228 = vsel %vm209, %v204, -inf
    %229 = vmax.xlane.f32.xlu0 %v228
    %v230 = vpop.xlane.xlu0 %229
    %v231 = vsel %vm209, %v207, -inf
    %232 = vmax.xlane.f32.xlu0 %v231
    %v233 = vpop.xlane.xlu0 %232
    %v234 = vsub.f32 %v186, %v212
    %v235 = vsub.f32 %v189, %v215
    %v236 = vsub.f32 %v192, %v218
    %v237 = vsub.f32 %v195, %v221
    %v238 = vsub.f32 %v198, %v224
    %v239 = vsub.f32 %v201, %v227
    %v240 = vsub.f32 %v204, %v230
    %v241 = vsub.f32 %v207, %v233
    %v242 = vmul.f32 %v234, 1.442695
    %v243 = vpow.pop %v242
    %v244 = vmul.f32 %v235, 1.442695
    %v245 = vpow.pop %v244
    %v246 = vmul.f32 %v236, 1.442695
    %v247 = vpow.pop %v246
    %v248 = vmul.f32 %v237, 1.442695
    %v249 = vpow.pop %v248
    %v250 = vmul.f32 %v238, 1.442695
    %v251 = vpow.pop %v250
    %v252 = vmul.f32 %v239, 1.442695
    %v253 = vpow.pop %v252
    %v254 = vmul.f32 %v240, 1.442695
    %v255 = vpow.pop %v254
    %v256 = vmul.f32 %v241, 1.442695
    %v257 = vpow.pop %v256
    %v258 = vsel %vm209, %v243, 0.0
    %259 = vadd.xlane.f32.xlu0 %v258
    %v260 = vpop.xlane.xlu0 %259
    %v261 = vsel %vm209, %v245, 0.0
    %262 = vadd.xlane.f32.xlu0 %v261
    %v263 = vpop.xlane.xlu0 %262
    %v264 = vsel %vm209, %v247, 0.0
    %265 = vadd.xlane.f32.xlu0 %v264
    %v266 = vpop.xlane.xlu0 %265
    %v267 = vsel %vm209, %v249, 0.0
    %268 = vadd.xlane.f32.xlu0 %v267
    %v269 = vpop.xlane.xlu0 %268
    %v270 = vsel %vm209, %v251, 0.0
    %271 = vadd.xlane.f32.xlu0 %v270
    %v272 = vpop.xlane.xlu0 %271
    %v273 = vsel %vm209, %v253, 0.0
    %274 = vadd.xlane.f32.xlu0 %v273
    %v275 = vpop.xlane.xlu0 %274
    %v276 = vsel %vm209, %v255, 0.0
    %277 = vadd.xlane.f32.xlu0 %v276
    %v278 = vpop.xlane.xlu0 %277
    %v279 = vsel %vm209, %v257, 0.0
    %280 = vadd.xlane.f32.xlu0 %v279
    %v281 = vpop.xlane.xlu0 %280
    %v282 = vrcp.pop %v260
    %v283 = vrcp.pop %v263
    %v284 = vrcp.pop %v266
    %v285 = vrcp.pop %v269
    %v286 = vrcp.pop %v272
    %v287 = vrcp.pop %v275
    %v288 = vrcp.pop %v278
    %v289 = vrcp.pop %v281
    %v290 = vmul.f32 %v243, %v282
    %v291 = vmul.f32 %v245, %v283
    %v292 = vmul.f32 %v247, %v284
    %v293 = vmul.f32 %v249, %v285
    %v294 = vmul.f32 %v251, %v286
    %v295 = vmul.f32 %v253, %v287
    %v296 = vmul.f32 %v255, %v288
    %v297 = vmul.f32 %v257, %v289
    %306 = vrot.lane.b32.xlu0 %v126, 64
    %v307 = vpop.permute.xlu0 %306
    %308 = vrot.lane.b32.xlu0 %v127, 64
    %v309 = vpop.permute.xlu0 %308
    %310 = vrot.lane.b32.xlu0 %v128, 64
    %v311 = vpop.permute.xlu0 %310
    %312 = vrot.lane.b32.xlu0 %v129, 64
    %v313 = vpop.permute.xlu0 %312
    %314 = vrot.lane.b32.xlu0 %v130, 64
    %v315 = vpop.permute.xlu0 %314
    %316 = vrot.lane.b32.xlu0 %v131, 64
    %v317 = vpop.permute.xlu0 %316
    %318 = vrot.lane.b32.xlu0 %v132, 64
    %v319 = vpop.permute.xlu0 %318
    %320 = vrot.lane.b32.xlu0 %v133, 64
    %v321 = vpop.permute.xlu0 %320
    %v331 = vsel %vm209, %v290, 0
    %v334 = vsel %vm209, %v291, 0
    %v337 = vsel %vm209, %v292, 0
    %v340 = vsel %vm209, %v293, 0
    %v343 = vsel %vm209, %v294, 0
    %v346 = vsel %vm209, %v295, 0
    %v349 = vsel %vm209, %v296, 0
    %v352 = vsel %vm209, %v297, 0
    %354 = vmatpush.msra.mxu0 0.0
    %355 = vmatpush.msra.mxu0 0.0
    %356 = vmatpush.msra.mxu0 0.0
    %357 = vmatpush.msra.mxu0 0.0
    %358 = vmatpush.msra.mxu0 0.0
    %359 = vmatpush.msra.mxu0 0.0
    %360 = vmatpush.msra.mxu0 0.0
    %361 = vmatpush.msra.mxu0 0.0
    %362 = vmatpush.msra.mxu0 %v321
    %363 = vmatpush.msra.mxu0 %v319
    %364 = vmatpush.msra.mxu0 %v317
    %365 = vmatpush.msra.mxu0 %v315
    %366 = vmatpush.msra.mxu0 %v313
    %367 = vmatpush.msra.mxu0 %v311
    %368 = vmatpush.msra.mxu0 %v309
    %369 = vmatpush.msra.mxu0 %v307
    %370 = vmatmul.f32.gmra.mxu0 %v331
    %v371 = vpop.f32.mrf.mxu0
    %v372 = vadd.f32 0.0, %v371
    %373 = vmatmul.f32.gmra.mxu0 %v334
    %v374 = vpop.f32.mrf.mxu0
    %v375 = vadd.f32 0.0, %v374
    %376 = vmatmul.f32.gmra.mxu0 %v337
    %v377 = vpop.f32.mrf.mxu0
    %v378 = vadd.f32 0.0, %v377
    %379 = vmatmul.f32.gmra.mxu0 %v340
    %v380 = vpop.f32.mrf.mxu0
    %v381 = vadd.f32 0.0, %v380
    %382 = vmatmul.f32.gmra.mxu0 %v343
    %v383 = vpop.f32.mrf.mxu0
    %v384 = vadd.f32 0.0, %v383
    %385 = vmatmul.f32.gmra.mxu0 %v346
    %v386 = vpop.f32.mrf.mxu0
    %v387 = vadd.f32 0.0, %v386
    %388 = vmatmul.f32.gmra.mxu0 %v349
    %v389 = vpop.f32.mrf.mxu0
    %v390 = vadd.f32 0.0, %v389
    %391 = vmatmul.f32.gmra.mxu0 %v352
    %v392 = vpop.f32.mrf.mxu0
    %v393 = vadd.f32 0.0, %v392
    %394 = vdwg.mxu0
    %v396 = vsel %vm51, %v372, 0
    %v399 = vsel %vm51, %v375, 0
    %v402 = vsel %vm51, %v378, 0
    %v405 = vsel %vm51, %v381, 0
    %v408 = vsel %vm51, %v384, 0
    %v411 = vsel %vm51, %v387, 0
    %v414 = vsel %vm51, %v390, 0
    %v417 = vsel %vm51, %v393, 0
    %419 = vmatpush.msra.mxu0 0.0
    %420 = vmatpush.msra.mxu0 0.0
    %421 = vmatpush.msra.mxu0 0.0
    %422 = vmatpush.msra.mxu0 0.0
    %423 = vmatpush.msra.mxu0 0.0
    %424 = vmatpush.msra.mxu0 0.0
    %425 = vmatpush.msra.mxu0 0.0
    %426 = vmatpush.msra.mxu0 0.0
    %427 = vmatpush.msra.mxu0 0.0
    %428 = vmatpush.msra.mxu0 0.0
    %429 = vmatpush.msra.mxu0 0.0
    %430 = vmatpush.msra.mxu0 0.0
    %431 = vmatpush.msra.mxu0 %v84
    %432 = vmatpush.msra.mxu0 %v83
    %433 = vmatpush.msra.mxu0 %v82
    %434 = vmatpush.msra.mxu0 %v81
    %435 = vmatmul.f32.gmra.mxu0 %v396
    %v436 = vpop.f32.mrf.mxu0
    %v437 = vadd.f32 0.0, %v436
    %438 = vmatmul.f32.gmra.mxu0 %v399
    %v439 = vpop.f32.mrf.mxu0
    %v440 = vadd.f32 0.0, %v439
    %441 = vmatmul.f32.gmra.mxu0 %v402
    %v442 = vpop.f32.mrf.mxu0
    %v443 = vadd.f32 0.0, %v442
    %444 = vmatmul.f32.gmra.mxu0 %v405
    %v445 = vpop.f32.mrf.mxu0
    %v446 = vadd.f32 0.0, %v445
    %447 = vmatmul.f32.gmra.mxu0 %v408
    %v448 = vpop.f32.mrf.mxu0
    %v449 = vadd.f32 0.0, %v448
    %450 = vmatmul.f32.gmra.mxu0 %v411
    %v451 = vpop.f32.mrf.mxu0
    %v452 = vadd.f32 0.0, %v451
    %453 = vmatmul.f32.gmra.mxu0 %v414
    %v454 = vpop.f32.mrf.mxu0
    %v455 = vadd.f32 0.0, %v454
    %456 = vmatmul.f32.gmra.mxu0 %v417
    %v457 = vpop.f32.mrf.mxu0
    %v458 = vadd.f32 0.0, %v457
    %459 = vdwg.mxu0
    %v460 = vadd.f32 %v437, %v443
    %v461 = vadd.f32 %v440, %v446
    %v462 = vadd.f32 %v460, %v449
    %v463 = vadd.f32 %v461, %v452
    %v464 = vadd.f32 %v462, %v455
    %v465 = vadd.f32 %v463, %v458
    %v466 = vadd.f32 %v464, %v85
    %v467 = vadd.f32 %v465, %v85
    %v468 = vadd.f32 %v466, %v18
    %v469 = vadd.f32 %v467, %v19
    %v470 = vld [vmem:[%s2 + $0x37] ss:$0 sm:$0xff]
    %v471 = vld [vmem:[%s2 + $0x68] ss:$0 sm:$0xff]
    %v472 = vsel %vm51, %v468, 0.0
    %473 = vadd.xlane.f32.xlu0 %v472
    %v474 = vpop.xlane.xlu0 %473
    %v475 = vsel %vm51, %v469, 0.0
    %476 = vadd.xlane.f32.xlu0 %v475
    %v477 = vpop.xlane.xlu0 %476
    %v478 = vrcp.pop 32.0
    %v479 = vmul.f32 32.0, %v478
    %v480 = vsub.f32 1.0, %v479
    %v481 = vmul.f32 %v478, %v480
    %v482 = vadd.f32 %v478, %v481
    %vm483 = vweird.f32 %v478
    %v484 = vsel %vm483, %v478, %v482
    %v485 = vmul.f32 %v474, %v484
    %v486 = vmul.f32 %v477, %v484
    %v487 = vsub.f32 %v468, %v485
    %v488 = vsub.f32 %v469, %v486
    %v489 = vmul.f32 %v487, %v487
    %v490 = vmul.f32 %v488, %v488
    %v491 = vsel %vm51, %v489, 0.0
    %492 = vadd.xlane.f32.xlu0 %v491
    %v493 = vpop.xlane.xlu0 %492
    %v494 = vsel %vm51, %v490, 0.0
    %495 = vadd.xlane.f32.xlu0 %v494
    %v496 = vpop.xlane.xlu0 %495
    %v497 = vmul.f32 %v493, %v484
    %v498 = vmul.f32 %v496, %v484
    %v499 = vadd.f32 %v497, 1e-05
    %v500 = vadd.f32 %v498, 1e-05
    %v501 = vrsqrt.pop %v499
    %v502 = vmul.f32 %v501, %v499
    %v503 = vmul.f32 %v502, %v501
    %v504 = vmul.f32 0.5, %v503
    %v505 = vsub.f32 1.5, %v504
    %v506 = vmul.f32 %v501, %v505
    %vm507 = vweird.f32 %v499
    %vm508 = vweird.f32 %v501
    %vm509 = vmor %vm507, %vm508
    %v510 = vsel %vm509, %v501, %v506
    %v511 = vrsqrt.pop %v500
    %v512 = vmul.f32 %v511, %v500
    %v513 = vmul.f32 %v512, %v511
    %v514 = vmul.f32 0.5, %v513
    %v515 = vsub.f32 1.5, %v514
    %v516 = vmul.f32 %v511, %v515
    %vm517 = vweird.f32 %v500
    %vm518 = vweird.f32 %v511
    %vm519 = vmor %vm517, %vm518
    %v520 = vsel %vm519, %v511, %v516
    %v521 = vmul.f32 %v487, %v510
    %v522 = vmul.f32 %v488, %v520
    %v523 = vmul.f32 %v521, %v470
    %v524 = vmul.f32 %v522, %v470
    %v525 = vadd.f32 %v523, %v471
    %v526 = vadd.f32 %v524, %v471
    %v527 = vld [vmem:[%s2 + $0x10] sm:$0xff]
    %v528 = vld [vmem:[%s2 + $0x48] sm:$0xff]
    %v529 = vld [vmem:[%s2 + $0x80] sm:$0xff]
    %v530 = vld [vmem:[%s2 + $0xb8] sm:$0xff]
    %v531 = vld [vmem:[%s2 + $0x32] ss:$0 sm:$0xff]
    %v533 = vsel %vm51, %v525, 0
    %v536 = vsel %vm51, %v526, 0
    %538 = vmatpush.msra.mxu0 0.0
    %539 = vmatpush.msra.mxu0 0.0
    %540 = vmatpush.msra.mxu0 0.0
    %541 = vmatpush.msra.mxu0 0.0
    %542 = vmatpush.msra.mxu0 0.0
    %543 = vmatpush.msra.mxu0 0.0
    %544 = vmatpush.msra.mxu0 0.0
    %545 = vmatpush.msra.mxu0 0.0
    %546 = vmatpush.msra.mxu0 0.0
    %547 = vmatpush.msra.mxu0 0.0
    %548 = vmatpush.msra.mxu0 0.0
    %549 = vmatpush.msra.mxu0 0.0
    %550 = vmatpush.msra.mxu0 %v530
    %551 = vmatpush.msra.mxu0 %v529
    %552 = vmatpush.msra.mxu0 %v528
    %553 = vmatpush.msra.mxu0 %v527
    %554 = vmatmul.f32.gmra.mxu0 %v533
    %v555 = vpop.f32.mrf.mxu0
    %v556 = vadd.f32 %v531, %v555
    %557 = vmatmul.f32.gmra.mxu0 %v536
    %v558 = vpop.f32.mrf.mxu0
    %v559 = vadd.f32 %v531, %v558
    %560 = vdwg.mxu0
    %v561 = vld [vmem:[%s2 + $0x18] sm:$0xff]
    %v562 = vld [vmem:[%s2 + $0x50] sm:$0xff]
    %v563 = vld [vmem:[%s2 + $0x88] sm:$0xff]
    %v564 = vld [vmem:[%s2 + $0xc0] sm:$0xff]
    %v565 = vld [vmem:[%s2 + $0x33] ss:$0 sm:$0xff]
    %v567 = vsel %vm51, %v20, 0
    %v570 = vsel %vm51, %v21, 0
    %572 = vmatpush.msra.mxu0 0.0
    %573 = vmatpush.msra.mxu0 0.0
    %574 = vmatpush.msra.mxu0 0.0
    %575 = vmatpush.msra.mxu0 0.0
    %576 = vmatpush.msra.mxu0 0.0
    %577 = vmatpush.msra.mxu0 0.0
    %578 = vmatpush.msra.mxu0 0.0
    %579 = vmatpush.msra.mxu0 0.0
    %580 = vmatpush.msra.mxu0 0.0
    %581 = vmatpush.msra.mxu0 0.0
    %582 = vmatpush.msra.mxu0 0.0
    %583 = vmatpush.msra.mxu0 0.0
    %584 = vmatpush.msra.mxu0 %v564
    %585 = vmatpush.msra.mxu0 %v563
    %586 = vmatpush.msra.mxu0 %v562
    %587 = vmatpush.msra.mxu0 %v561
    %588 = vmatmul.f32.gmra.mxu0 %v567
    %v589 = vpop.f32.mrf.mxu0
    %v590 = vadd.f32 %v565, %v589
    %591 = vmatmul.f32.gmra.mxu0 %v570
    %v592 = vpop.f32.mrf.mxu0
    %v593 = vadd.f32 %v565, %v592
    %594 = vdwg.mxu0
    %v595 = vld [vmem:[%s2 + $0x20] sm:$0xff]
    %v596 = vld [vmem:[%s2 + $0x58] sm:$0xff]
    %v597 = vld [vmem:[%s2 + $0x90] sm:$0xff]
    %v598 = vld [vmem:[%s2 + $0xc8] sm:$0xff]
    %v599 = vld [vmem:[%s2 + $0x34] ss:$0 sm:$0xff]
    %v600 = vmul.f32 %v556, %v38
    %v601 = vmul.f32 %v559, %v39
    %v602 = vmul.f32 %v556, %v40
    %v603 = vmul.f32 %v559, %v41
    %v604 = vmul.f32 %v556, %v42
    %v605 = vmul.f32 %v559, %v43
    %v606 = vmul.f32 %v556, %v44
    %v607 = vmul.f32 %v559, %v45
    %608 = vrot.lane.b32.xlu0 %v38, 32
    %v609 = vpop.permute.xlu0 %608
    %610 = vrot.lane.b32.xlu0 %v39, 32
    %v611 = vpop.permute.xlu0 %610
    %612 = vrot.lane.b32.xlu0 %v40, 32
    %v613 = vpop.permute.xlu0 %612
    %614 = vrot.lane.b32.xlu0 %v41, 32
    %v615 = vpop.permute.xlu0 %614
    %616 = vrot.lane.b32.xlu0 %v42, 32
    %v617 = vpop.permute.xlu0 %616
    %618 = vrot.lane.b32.xlu0 %v43, 32
    %v619 = vpop.permute.xlu0 %618
    %620 = vrot.lane.b32.xlu0 %v44, 32
    %v621 = vpop.permute.xlu0 %620
    %622 = vrot.lane.b32.xlu0 %v45, 32
    %v623 = vpop.permute.xlu0 %622
    %v632 = vmul.f32 %v590, %v609
    %v633 = vmul.f32 %v593, %v611
    %v634 = vmul.f32 %v590, %v613
    %v635 = vmul.f32 %v593, %v615
    %v636 = vmul.f32 %v590, %v617
    %v637 = vmul.f32 %v593, %v619
    %v638 = vmul.f32 %v590, %v621
    %v639 = vmul.f32 %v593, %v623
    %v641 = vsel %vm51, %v600, 0
    %v644 = vsel %vm51, %v601, 0
    %v647 = vsel %vm51, %v602, 0
    %v650 = vsel %vm51, %v603, 0
    %v653 = vsel %vm51, %v604, 0
    %v656 = vsel %vm51, %v605, 0
    %v659 = vsel %vm51, %v606, 0
    %v662 = vsel %vm51, %v607, 0
    %v665 = vsel %vm51, %v590, 0
    %v668 = vsel %vm51, %v593, 0
    %670 = vmatpush.xpose.msra.mxu0 0.0
    %671 = vmatpush.xpose.msra.mxu0 0.0
    %672 = vmatpush.xpose.msra.mxu0 0.0
    %673 = vmatpush.xpose.msra.mxu0 0.0
    %674 = vmatpush.xpose.msra.mxu0 0.0
    %675 = vmatpush.xpose.msra.mxu0 0.0
    %676 = vmatpush.xpose.msra.mxu0 0.0
    %677 = vmatpush.xpose.msra.mxu0 0.0
    %678 = vmatpush.xpose.msra.mxu0 %v668
    %679 = vmatpush.xpose.msra.mxu0 %v665
    %680 = vmatpush.xpose.msra.mxu0 %v668
    %681 = vmatpush.xpose.msra.mxu0 %v665
    %682 = vmatpush.xpose.msra.mxu0 %v668
    %683 = vmatpush.xpose.msra.mxu0 %v665
    %684 = vmatpush.xpose.msra.mxu0 %v668
    %685 = vmatpush.xpose.msra.mxu0 %v665
    %686 = vmatmul.f32.gmra.mxu0 %v641
    %v687 = vpop.f32.mrf.mxu0
    %v688 = vadd.f32 %v30, %v687
    %689 = vmatmul.f32.gmra.mxu0 %v644
    %v690 = vpop.f32.mrf.mxu0
    %v691 = vadd.f32 %v31, %v690
    %692 = vmatmul.f32.gmra.mxu0 %v647
    %v693 = vpop.f32.mrf.mxu0
    %v694 = vadd.f32 %v32, %v693
    %695 = vmatmul.f32.gmra.mxu0 %v650
    %v696 = vpop.f32.mrf.mxu0
    %v697 = vadd.f32 %v33, %v696
    %698 = vmatmul.f32.gmra.mxu0 %v653
    %v699 = vpop.f32.mrf.mxu0
    %v700 = vadd.f32 %v34, %v699
    %701 = vmatmul.f32.gmra.mxu0 %v656
    %v702 = vpop.f32.mrf.mxu0
    %v703 = vadd.f32 %v35, %v702
    %704 = vmatmul.f32.gmra.mxu0 %v659
    %v705 = vpop.f32.mrf.mxu0
    %v706 = vadd.f32 %v36, %v705
    %707 = vmatmul.f32.gmra.mxu0 %v662
    %v708 = vpop.f32.mrf.mxu0
    %v709 = vadd.f32 %v37, %v708
    %710 = vdwg.mxu0
    %v711 = vsel %vm209, %v688, -inf
    %712 = vmax.xlane.f32.xlu0 %v711
    %v713 = vpop.xlane.xlu0 %712
    %v714 = vsel %vm209, %v691, -inf
    %715 = vmax.xlane.f32.xlu0 %v714
    %v716 = vpop.xlane.xlu0 %715
    %v717 = vsel %vm209, %v694, -inf
    %718 = vmax.xlane.f32.xlu0 %v717
    %v719 = vpop.xlane.xlu0 %718
    %v720 = vsel %vm209, %v697, -inf
    %721 = vmax.xlane.f32.xlu0 %v720
    %v722 = vpop.xlane.xlu0 %721
    %v723 = vsel %vm209, %v700, -inf
    %724 = vmax.xlane.f32.xlu0 %v723
    %v725 = vpop.xlane.xlu0 %724
    %v726 = vsel %vm209, %v703, -inf
    %727 = vmax.xlane.f32.xlu0 %v726
    %v728 = vpop.xlane.xlu0 %727
    %v729 = vsel %vm209, %v706, -inf
    %730 = vmax.xlane.f32.xlu0 %v729
    %v731 = vpop.xlane.xlu0 %730
    %v732 = vsel %vm209, %v709, -inf
    %733 = vmax.xlane.f32.xlu0 %v732
    %v734 = vpop.xlane.xlu0 %733
    %v735 = vsub.f32 %v688, %v713
    %v736 = vsub.f32 %v691, %v716
    %v737 = vsub.f32 %v694, %v719
    %v738 = vsub.f32 %v697, %v722
    %v739 = vsub.f32 %v700, %v725
    %v740 = vsub.f32 %v703, %v728
    %v741 = vsub.f32 %v706, %v731
    %v742 = vsub.f32 %v709, %v734
    %v743 = vmul.f32 %v735, 1.442695
    %v744 = vpow.pop %v743
    %v745 = vmul.f32 %v736, 1.442695
    %v746 = vpow.pop %v745
    %v747 = vmul.f32 %v737, 1.442695
    %v748 = vpow.pop %v747
    %v749 = vmul.f32 %v738, 1.442695
    %v750 = vpow.pop %v749
    %v751 = vmul.f32 %v739, 1.442695
    %v752 = vpow.pop %v751
    %v753 = vmul.f32 %v740, 1.442695
    %v754 = vpow.pop %v753
    %v755 = vmul.f32 %v741, 1.442695
    %v756 = vpow.pop %v755
    %v757 = vmul.f32 %v742, 1.442695
    %v758 = vpow.pop %v757
    %v759 = vsel %vm209, %v744, 0.0
    %760 = vadd.xlane.f32.xlu0 %v759
    %v761 = vpop.xlane.xlu0 %760
    %v762 = vsel %vm209, %v746, 0.0
    %763 = vadd.xlane.f32.xlu0 %v762
    %v764 = vpop.xlane.xlu0 %763
    %v765 = vsel %vm209, %v748, 0.0
    %766 = vadd.xlane.f32.xlu0 %v765
    %v767 = vpop.xlane.xlu0 %766
    %v768 = vsel %vm209, %v750, 0.0
    %769 = vadd.xlane.f32.xlu0 %v768
    %v770 = vpop.xlane.xlu0 %769
    %v771 = vsel %vm209, %v752, 0.0
    %772 = vadd.xlane.f32.xlu0 %v771
    %v773 = vpop.xlane.xlu0 %772
    %v774 = vsel %vm209, %v754, 0.0
    %775 = vadd.xlane.f32.xlu0 %v774
    %v776 = vpop.xlane.xlu0 %775
    %v777 = vsel %vm209, %v756, 0.0
    %778 = vadd.xlane.f32.xlu0 %v777
    %v779 = vpop.xlane.xlu0 %778
    %v780 = vsel %vm209, %v758, 0.0
    %781 = vadd.xlane.f32.xlu0 %v780
    %v782 = vpop.xlane.xlu0 %781
    %v783 = vrcp.pop %v761
    %v784 = vrcp.pop %v764
    %v785 = vrcp.pop %v767
    %v786 = vrcp.pop %v770
    %v787 = vrcp.pop %v773
    %v788 = vrcp.pop %v776
    %v789 = vrcp.pop %v779
    %v790 = vrcp.pop %v782
    %v791 = vmul.f32 %v744, %v783
    %v792 = vmul.f32 %v746, %v784
    %v793 = vmul.f32 %v748, %v785
    %v794 = vmul.f32 %v750, %v786
    %v795 = vmul.f32 %v752, %v787
    %v796 = vmul.f32 %v754, %v788
    %v797 = vmul.f32 %v756, %v789
    %v798 = vmul.f32 %v758, %v790
    %807 = vrot.lane.b32.xlu0 %v632, 96
    %v808 = vpop.permute.xlu0 %807
    %809 = vrot.lane.b32.xlu0 %v633, 96
    %v810 = vpop.permute.xlu0 %809
    %811 = vrot.lane.b32.xlu0 %v634, 96
    %v812 = vpop.permute.xlu0 %811
    %813 = vrot.lane.b32.xlu0 %v635, 96
    %v814 = vpop.permute.xlu0 %813
    %815 = vrot.lane.b32.xlu0 %v636, 96
    %v816 = vpop.permute.xlu0 %815
    %817 = vrot.lane.b32.xlu0 %v637, 96
    %v818 = vpop.permute.xlu0 %817
    %819 = vrot.lane.b32.xlu0 %v638, 96
    %v820 = vpop.permute.xlu0 %819
    %821 = vrot.lane.b32.xlu0 %v639, 96
    %v822 = vpop.permute.xlu0 %821
    %v832 = vsel %vm209, %v791, 0
    %v835 = vsel %vm209, %v792, 0
    %v838 = vsel %vm209, %v793, 0
    %v841 = vsel %vm209, %v794, 0
    %v844 = vsel %vm209, %v795, 0
    %v847 = vsel %vm209, %v796, 0
    %v850 = vsel %vm209, %v797, 0
    %v853 = vsel %vm209, %v798, 0
    %855 = vmatpush.msra.mxu0 0.0
    %856 = vmatpush.msra.mxu0 0.0
    %857 = vmatpush.msra.mxu0 0.0
    %858 = vmatpush.msra.mxu0 0.0
    %859 = vmatpush.msra.mxu0 0.0
    %860 = vmatpush.msra.mxu0 0.0
    %861 = vmatpush.msra.mxu0 0.0
    %862 = vmatpush.msra.mxu0 0.0
    %863 = vmatpush.msra.mxu0 %v822
    %864 = vmatpush.msra.mxu0 %v820
    %865 = vmatpush.msra.mxu0 %v818
    %866 = vmatpush.msra.mxu0 %v816
    %867 = vmatpush.msra.mxu0 %v814
    %868 = vmatpush.msra.mxu0 %v812
    %869 = vmatpush.msra.mxu0 %v810
    %870 = vmatpush.msra.mxu0 %v808
    %871 = vmatmul.f32.gmra.mxu0 %v832
    %v872 = vpop.f32.mrf.mxu0
    %v873 = vadd.f32 0.0, %v872
    %874 = vmatmul.f32.gmra.mxu0 %v835
    %v875 = vpop.f32.mrf.mxu0
    %v876 = vadd.f32 0.0, %v875
    %877 = vmatmul.f32.gmra.mxu0 %v838
    %v878 = vpop.f32.mrf.mxu0
    %v879 = vadd.f32 0.0, %v878
    %880 = vmatmul.f32.gmra.mxu0 %v841
    %v881 = vpop.f32.mrf.mxu0
    %v882 = vadd.f32 0.0, %v881
    %883 = vmatmul.f32.gmra.mxu0 %v844
    %v884 = vpop.f32.mrf.mxu0
    %v885 = vadd.f32 0.0, %v884
    %886 = vmatmul.f32.gmra.mxu0 %v847
    %v887 = vpop.f32.mrf.mxu0
    %v888 = vadd.f32 0.0, %v887
    %889 = vmatmul.f32.gmra.mxu0 %v850
    %v890 = vpop.f32.mrf.mxu0
    %v891 = vadd.f32 0.0, %v890
    %892 = vmatmul.f32.gmra.mxu0 %v853
    %v893 = vpop.f32.mrf.mxu0
    %v894 = vadd.f32 0.0, %v893
    %895 = vdwg.mxu0
    %v897 = vsel %vm51, %v873, 0
    %v900 = vsel %vm51, %v876, 0
    %v903 = vsel %vm51, %v879, 0
    %v906 = vsel %vm51, %v882, 0
    %v909 = vsel %vm51, %v885, 0
    %v912 = vsel %vm51, %v888, 0
    %v915 = vsel %vm51, %v891, 0
    %v918 = vsel %vm51, %v894, 0
    %920 = vmatpush.msra.mxu0 0.0
    %921 = vmatpush.msra.mxu0 0.0
    %922 = vmatpush.msra.mxu0 0.0
    %923 = vmatpush.msra.mxu0 0.0
    %924 = vmatpush.msra.mxu0 0.0
    %925 = vmatpush.msra.mxu0 0.0
    %926 = vmatpush.msra.mxu0 0.0
    %927 = vmatpush.msra.mxu0 0.0
    %928 = vmatpush.msra.mxu0 0.0
    %929 = vmatpush.msra.mxu0 0.0
    %930 = vmatpush.msra.mxu0 0.0
    %931 = vmatpush.msra.mxu0 0.0
    %932 = vmatpush.msra.mxu0 %v598
    %933 = vmatpush.msra.mxu0 %v597
    %934 = vmatpush.msra.mxu0 %v596
    %935 = vmatpush.msra.mxu0 %v595
    %936 = vmatmul.f32.gmra.mxu0 %v897
    %v937 = vpop.f32.mrf.mxu0
    %v938 = vadd.f32 0.0, %v937
    %939 = vmatmul.f32.gmra.mxu0 %v900
    %v940 = vpop.f32.mrf.mxu0
    %v941 = vadd.f32 0.0, %v940
    %942 = vmatmul.f32.gmra.mxu0 %v903
    %v943 = vpop.f32.mrf.mxu0
    %v944 = vadd.f32 0.0, %v943
    %945 = vmatmul.f32.gmra.mxu0 %v906
    %v946 = vpop.f32.mrf.mxu0
    %v947 = vadd.f32 0.0, %v946
    %948 = vmatmul.f32.gmra.mxu0 %v909
    %v949 = vpop.f32.mrf.mxu0
    %v950 = vadd.f32 0.0, %v949
    %951 = vmatmul.f32.gmra.mxu0 %v912
    %v952 = vpop.f32.mrf.mxu0
    %v953 = vadd.f32 0.0, %v952
    %954 = vmatmul.f32.gmra.mxu0 %v915
    %v955 = vpop.f32.mrf.mxu0
    %v956 = vadd.f32 0.0, %v955
    %957 = vmatmul.f32.gmra.mxu0 %v918
    %v958 = vpop.f32.mrf.mxu0
    %v959 = vadd.f32 0.0, %v958
    %960 = vdwg.mxu0
    %v961 = vadd.f32 %v938, %v944
    %v962 = vadd.f32 %v941, %v947
    %v963 = vadd.f32 %v961, %v950
    %v964 = vadd.f32 %v962, %v953
    %v965 = vadd.f32 %v963, %v956
    %v966 = vadd.f32 %v964, %v959
    %v967 = vadd.f32 %v965, %v599
    %v968 = vadd.f32 %v966, %v599
    %v969 = vadd.f32 %v967, %v525
    %v970 = vadd.f32 %v968, %v526
    %v971 = vld [vmem:[%s2 + $0x69] ss:$0 sm:$0xff]
    %v972 = vld [vmem:[%s2 + $0x6a] ss:$0 sm:$0xff]
    %v973 = vsel %vm51, %v969, 0.0
    %974 = vadd.xlane.f32.xlu0 %v973
    %v975 = vpop.xlane.xlu0 %974
    %v976 = vsel %vm51, %v970, 0.0
    %977 = vadd.xlane.f32.xlu0 %v976
    %v978 = vpop.xlane.xlu0 %977
    %v979 = vmul.f32 %v975, %v484
    %v980 = vmul.f32 %v978, %v484
    %v981 = vsub.f32 %v969, %v979
    %v982 = vsub.f32 %v970, %v980
    %v983 = vmul.f32 %v981, %v981
    %v984 = vmul.f32 %v982, %v982
    %v985 = vsel %vm51, %v983, 0.0
    %986 = vadd.xlane.f32.xlu0 %v985
    %v987 = vpop.xlane.xlu0 %986
    %v988 = vsel %vm51, %v984, 0.0
    %989 = vadd.xlane.f32.xlu0 %v988
    %v990 = vpop.xlane.xlu0 %989
    %v991 = vmul.f32 %v987, %v484
    %v992 = vmul.f32 %v990, %v484
    %v993 = vadd.f32 %v991, 1e-05
    %v994 = vadd.f32 %v992, 1e-05
    %v995 = vrsqrt.pop %v993
    %v996 = vmul.f32 %v995, %v993
    %v997 = vmul.f32 %v996, %v995
    %v998 = vmul.f32 0.5, %v997
    %v999 = vsub.f32 1.5, %v998
    %v1000 = vmul.f32 %v995, %v999
    %vm1001 = vweird.f32 %v993
    %vm1002 = vweird.f32 %v995
    %vm1003 = vmor %vm1001, %vm1002
    %v1004 = vsel %vm1003, %v995, %v1000
    %v1005 = vrsqrt.pop %v994
    %v1006 = vmul.f32 %v1005, %v994
    %v1007 = vmul.f32 %v1006, %v1005
    %v1008 = vmul.f32 0.5, %v1007
    %v1009 = vsub.f32 1.5, %v1008
    %v1010 = vmul.f32 %v1005, %v1009
    %vm1011 = vweird.f32 %v994
    %vm1012 = vweird.f32 %v1005
    %vm1013 = vmor %vm1011, %vm1012
    %v1014 = vsel %vm1013, %v1005, %v1010
    %v1015 = vmul.f32 %v981, %v1004
    %v1016 = vmul.f32 %v982, %v1014
    %v1017 = vmul.f32 %v1015, %v971
    %v1018 = vmul.f32 %v1016, %v971
    %v1019 = vadd.f32 %v1017, %v972
    %v1020 = vadd.f32 %v1018, %v972
    %v1021 = vld [vmem:[%s2 + $0x28] sm:$0xff]
    %v1022 = vld [vmem:[%s2 + $0x60] sm:$0xff]
    %v1023 = vld [vmem:[%s2 + $0x98] sm:$0xff]
    %v1024 = vld [vmem:[%s2 + $0xd0] sm:$0xff]
    %v1025 = vld [vmem:[%s2 + $0x35] ss:$0 sm:$0xff]
    %v1027 = vsel %vm51, %v1019, 0
    %v1030 = vsel %vm51, %v1020, 0
    %1032 = vmatpush.msra.mxu0 0.0
    %1033 = vmatpush.msra.mxu0 0.0
    %1034 = vmatpush.msra.mxu0 0.0
    %1035 = vmatpush.msra.mxu0 0.0
    %1036 = vmatpush.msra.mxu0 0.0
    %1037 = vmatpush.msra.mxu0 0.0
    %1038 = vmatpush.msra.mxu0 0.0
    %1039 = vmatpush.msra.mxu0 0.0
    %1040 = vmatpush.msra.mxu0 0.0
    %1041 = vmatpush.msra.mxu0 0.0
    %1042 = vmatpush.msra.mxu0 0.0
    %1043 = vmatpush.msra.mxu0 0.0
    %1044 = vmatpush.msra.mxu0 %v1024
    %1045 = vmatpush.msra.mxu0 %v1023
    %1046 = vmatpush.msra.mxu0 %v1022
    %1047 = vmatpush.msra.mxu0 %v1021
    %1048 = vmatmul.f32.gmra.mxu0 %v1027
    %v1049 = vpop.f32.mrf.mxu0
    %v1050 = vadd.f32 %v1025, %v1049
    %1051 = vmatmul.f32.gmra.mxu0 %v1030
    %v1052 = vpop.f32.mrf.mxu0
    %v1053 = vadd.f32 %v1025, %v1052
    %1054 = vdwg.mxu0
    %v1055 = vmax.f32 %v1050, 0.0
    %v1056 = vmax.f32 %v1053, 0.0
    %v1057 = vld [vmem:[%s3] sm:$0xff]
    %v1058 = vld [vmem:[%s3 + $0x8] sm:$0xff]
    %v1059 = vld [vmem:[%s3 + $0x10] sm:$0xff]
    %v1060 = vld [vmem:[%s3 + $0x18] sm:$0xff]
    %v1061 = vld [vmem:[%s3 + $0x20] sm:$0xff]
    %v1062 = vld [vmem:[%s3 + $0x28] sm:$0xff]
    %v1063 = vld [vmem:[%s3 + $0x30] sm:$0xff]
    %v1064 = vld [vmem:[%s3 + $0x38] sm:$0xff]
    %v1065 = vld [vmem:[%s2 + $0x36] ss:$0 sm:$0xff]
    %v1067 = vsel %vm209, %v1055, 0
    %v1070 = vsel %vm209, %v1056, 0
    %1072 = vmatpush.msra.mxu0 0.0
    %1073 = vmatpush.msra.mxu0 0.0
    %1074 = vmatpush.msra.mxu0 0.0
    %1075 = vmatpush.msra.mxu0 0.0
    %1076 = vmatpush.msra.mxu0 0.0
    %1077 = vmatpush.msra.mxu0 0.0
    %1078 = vmatpush.msra.mxu0 0.0
    %1079 = vmatpush.msra.mxu0 0.0
    %1080 = vmatpush.msra.mxu0 %v1064
    %1081 = vmatpush.msra.mxu0 %v1063
    %1082 = vmatpush.msra.mxu0 %v1062
    %1083 = vmatpush.msra.mxu0 %v1061
    %1084 = vmatpush.msra.mxu0 %v1060
    %1085 = vmatpush.msra.mxu0 %v1059
    %1086 = vmatpush.msra.mxu0 %v1058
    %1087 = vmatpush.msra.mxu0 %v1057
    %1088 = vmatmul.f32.gmra.mxu0 %v1067
    %v1089 = vpop.f32.mrf.mxu0
    %v1090 = vadd.f32 %v1065, %v1089
    %1091 = vmatmul.f32.gmra.mxu0 %v1070
    %v1092 = vpop.f32.mrf.mxu0
    %v1093 = vadd.f32 %v1065, %v1092
    %1094 = vdwg.mxu0
    %v1095 = vadd.f32 %v1090, %v1019
    %v1096 = vadd.f32 %v1093, %v1020
    %v1097 = vld [vmem:[%s2 + $0x6b] ss:$0 sm:$0xff]
    %v1098 = vld [vmem:[%s2 + $0x6c] ss:$0 sm:$0xff]
    %v1099 = vsel %vm51, %v1095, 0.0
    %1100 = vadd.xlane.f32.xlu0 %v1099
    %v1101 = vpop.xlane.xlu0 %1100
    %v1102 = vsel %vm51, %v1096, 0.0
    %1103 = vadd.xlane.f32.xlu0 %v1102
    %v1104 = vpop.xlane.xlu0 %1103
    %v1105 = vmul.f32 %v1101, %v484
    %v1106 = vmul.f32 %v1104, %v484
    %v1107 = vsub.f32 %v1095, %v1105
    %v1108 = vsub.f32 %v1096, %v1106
    %v1109 = vmul.f32 %v1107, %v1107
    %v1110 = vmul.f32 %v1108, %v1108
    %v1111 = vsel %vm51, %v1109, 0.0
    %1112 = vadd.xlane.f32.xlu0 %v1111
    %v1113 = vpop.xlane.xlu0 %1112
    %v1114 = vsel %vm51, %v1110, 0.0
    %1115 = vadd.xlane.f32.xlu0 %v1114
    %v1116 = vpop.xlane.xlu0 %1115
    %v1117 = vmul.f32 %v1113, %v484
    %v1118 = vmul.f32 %v1116, %v484
    %v1119 = vadd.f32 %v1117, 1e-05
    %v1120 = vadd.f32 %v1118, 1e-05
    %v1121 = vrsqrt.pop %v1119
    %v1122 = vmul.f32 %v1121, %v1119
    %v1123 = vmul.f32 %v1122, %v1121
    %v1124 = vmul.f32 0.5, %v1123
    %v1125 = vsub.f32 1.5, %v1124
    %v1126 = vmul.f32 %v1121, %v1125
    %vm1127 = vweird.f32 %v1119
    %vm1128 = vweird.f32 %v1121
    %vm1129 = vmor %vm1127, %vm1128
    %v1130 = vsel %vm1129, %v1121, %v1126
    %v1131 = vrsqrt.pop %v1120
    %v1132 = vmul.f32 %v1131, %v1120
    %v1133 = vmul.f32 %v1132, %v1131
    %v1134 = vmul.f32 0.5, %v1133
    %v1135 = vsub.f32 1.5, %v1134
    %v1136 = vmul.f32 %v1131, %v1135
    %vm1137 = vweird.f32 %v1120
    %vm1138 = vweird.f32 %v1131
    %vm1139 = vmor %vm1137, %vm1138
    %v1140 = vsel %vm1139, %v1131, %v1136
    %v1141 = vmul.f32 %v1107, %v1130
    %v1142 = vmul.f32 %v1108, %v1140
    %v1143 = vmul.f32 %v1141, %v1097
    %v1144 = vmul.f32 %v1142, %v1097
    %v1145 = vadd.f32 %v1143, %v1098
    %v1146 = vadd.f32 %v1144, %v1098
    %1147 = vst.msk [vmem:[#allocation2] sm:$0xff] %vm51, %v1145
    %1148 = vst.msk [vmem:[#allocation2 + $0x8] sm:$0xff] %vm51, %v1146
    // Predicated region
    $region18: #{custom_decoder_forward.1} parent=1 // pred_check
      _
    $region19: #{custom_decoder_forward.1} parent=1 // pred_check_branch
      %1150 = sbr.rel (0) target = $region21
    $region20: #{custom_decoder_forward.1} parent=1 // pred_region
      %1152 = vsyncadd [#allocation3], 0
      %s1153 = sshll.u32 [#allocation2], 4
      %s1154 = int_to_ptr.vmem [resolvable:$true] %s1153
      %s1155 = sshll.u32 %s4, 4
      %s1156 = int_to_ptr.hbm [resolvable:$true] %s1155
      %1161 = dma.vmem_to_hbm [thread:$0]  %s1154, 256, %s1156, [#allocation3], 128, 128, 8
    $region21: #{custom_decoder_forward.1} parent=1 // pred_fallthru
      _
    // Predicated region
    $region22: #{custom_decoder_forward.1} parent=1 // pred_check
      _
    $region23: #{custom_decoder_forward.1} parent=1 // pred_check_branch
      %1163 = sbr.rel (0) target = $region25
    $region24: #{custom_decoder_forward.1} parent=1 // pred_region
      %1165 = dma.done [#allocation3], 256
    $region25: #{custom_decoder_forward.1} parent=1 // pred_fallthru
      _
    %1166 = vsyncpa [#allocation3], 1

</llo_original>
